<compile_context>
chip_gen: v6e
topology: v6e:2x2x1
jax: 0.10.0
libtpu: 0.0.40
codegen_flags: <defaults>
</compile_context>

<pallas_src>
import jax
import jax.numpy as jnp
from jax import lax
from jax.experimental import pallas as pl
from jax.experimental.pallas import tpu as pltpu


_NEG_INF = -1e30  # pad value for logit columns -> softmax of padded classes == 0


def _cdiv(a, b):
    return (a + b - 1) // b


def _round_up(a, b):
    return _cdiv(a, b) * b


def _miou_kernel(x_ref, t_ref, inter_ref, union_ref):
    """Accumulate per-class inter/union partial sums for one row tile.

    x_ref     : (tile_n, C_pad) logits (f32 or bf16)
    t_ref     : (1, tile_n) or (tile_n, 1) int32 class ids (-1 marks pad rows)
    inter_ref : (8, C_pad) f32 accumulator (resident across grid axis 1)
    union_ref : (8, C_pad) f32 accumulator (resident across grid axis 1)
    """
    j = pl.program_id(1)

    @pl.when(j == 0)
    def _():
        inter_ref[...] = jnp.zeros_like(inter_ref)
        union_ref[...] = jnp.zeros_like(union_ref)

    x = x_ref[...].astype(jnp.float32)                 # (TN, Cp)
    tn, cp = x.shape

    t_raw = t_ref[...]
    if t_raw.shape[0] == 1:
        # Lane-major (1, TN) target block: one small relayout to a column.
        t = t_raw.reshape(tn, 1)                       # (TN, 1) int32
    else:
        t = t_raw                                      # already (TN, 1)

    # one-hot(target) via broadcast compare against a (1, Cp) lane iota (no
    # tile-sized int32 iota temporary).  t == -1 (row padding) never matches,
    # so padded rows produce an all-zero one-hot row.
    class_iota = lax.broadcasted_iota(jnp.int32, (1, cp), dimension=1)
    onehot = (t == class_iota).astype(jnp.float32)     # (TN, Cp)
    valid = (t >= 0).astype(jnp.float32)               # (TN, 1)

    # Numerically-stable softmax: one exact reciprocal per row + a multiply
    # instead of a per-element divide; padded rows are zeroed via `valid`.
    m = jnp.max(x, axis=-1, keepdims=True)
    e = jnp.exp(x - m)
    inv = pl.reciprocal(jnp.sum(e, axis=-1, keepdims=True), approx=False)
    p = e * (inv * valid)                              # (TN, Cp)

    prod = p * onehot
    inter_tile = jnp.sum(prod, axis=0, keepdims=True)  # (1, Cp)
    # union = colsum(p) + per-class count - inter  (no (TN, Cp) union temp).
    union_tile = (jnp.sum(p, axis=0, keepdims=True)
                  + jnp.sum(onehot, axis=0, keepdims=True)
                  - inter_tile)

    inter_ref[...] += inter_tile    # broadcast add over the 8 sublanes
    union_ref[...] += union_tile


def _tpu_config():
    """Returns (vmem request cap in bytes, chip has 2 TensorCores)."""
    kind = ""
    try:
        kind = str(jax.devices()[0].device_kind).lower()
    except Exception:
        pass
    two_cores = ("v7" in kind) or ("7x" in kind)
    try:
        physical = int(pltpu.get_tpu_info().vmem_capacity_bytes)
    except Exception:
        physical = (64 << 20) if two_cores else (128 << 20)
    # Leave headroom for Mosaic internal scratch; never request all of VMEM.
    cap = min(physical - (8 << 20), 100 << 20)
    if two_cores:                      # v7x: 64 MiB per TensorCore
        cap = min(cap, 56 << 20)
    return max(cap, 32 << 20), two_cores


def _pick_tile_n(n_rows, c_pad, num_splits, in_bytes, vmem_cap):
    """Largest 128-aligned row tile that fits the (honest) VMEM budget."""
    # Target an ~8 MiB logits tile so per-grid-step overhead amortizes.
    rows_by_tile = max(128, (8 << 20) // (c_pad * in_bytes))
    per_row = (2 * c_pad * in_bytes   # double-buffered logits tile
               + 2 * 128 * 4          # (tile_n, 1) i32 target block (lane-pads to 128), x2
               + 5 * c_pad * 4        # body temps: e, p, onehot, prod + upcast/misc (f32)
               + 64)                  # small per-row slack
    usable = int(vmem_cap * 0.85) - (4 << 20)   # margin for outputs + compiler scratch
    rows_by_vmem = max(128, usable // per_row)
    needed = _round_up(max(_cdiv(n_rows, num_splits), 1), 128)
    tn = max(128, min(rows_by_tile, rows_by_vmem, needed))
    return (tn // 128) * 128


def miou_loss(inputs, target, *, tile_n=None, num_splits=None):
    """inputs: (N, C) float logits; target: (N,) int class ids -> scalar f32 loss."""
    N, C = inputs.shape
    C_pad = _round_up(C, 128)
    vmem_cap, two_cores = _tpu_config()
    if num_splits is None:
        num_splits = 2 if two_cores else 1   # one split per TensorCore

    x_dtype = inputs.dtype if jnp.issubdtype(inputs.dtype, jnp.floating) else jnp.float32
    in_bytes = jnp.dtype(x_dtype).itemsize
    if tile_n is None:
        tile_n = _pick_tile_n(N, C_pad, num_splits, in_bytes, vmem_cap)
    tile_n = max(128, _round_up(tile_n, 128))
    N_pad = _round_up(N, num_splits * tile_n)
    tiles_per_split = N_pad // (num_splits * tile_n)

    # bf16 logits stay bf16 in HBM/VMEM (halves the dominant read); the kernel
    # upcasts to f32 for the softmax math.  -1e30 is representable in bf16.
    x = inputs.astype(x_dtype)
    if C_pad != C:
        x = jnp.pad(x, ((0, 0), (0, C_pad - C)), constant_values=_NEG_INF)
    if N_pad != N:
        x = jnp.pad(x, ((0, N_pad - N), (0, 0)))
    t1d = target.astype(jnp.int32).reshape(-1)
    if N_pad != N:
        t1d = jnp.pad(t1d, (0, N_pad - N), constant_values=-1)

    row_block = lambda i, j: (i * tiles_per_split + j, 0)
    lane_block = lambda i, j: (0, i * tiles_per_split + j)
    out_block = lambda i, j: (i, 0)

    def run(dim_sems, lane_major_target):
        if lane_major_target:
            t = t1d.reshape(1, N_pad)
            t_spec = pl.BlockSpec((1, tile_n), lane_block)
        else:
            t = t1d.reshape(N_pad, 1)
            t_spec = pl.BlockSpec((tile_n, 1), row_block)
        return pl.pallas_call(
            _miou_kernel,
            out_shape=(
                jax.ShapeDtypeStruct((num_splits * 8, C_pad), jnp.float32),
                jax.ShapeDtypeStruct((num_splits * 8, C_pad), jnp.float32),
            ),
            grid_spec=pltpu.PrefetchScalarGridSpec(
                num_scalar_prefetch=0,
                grid=(num_splits, tiles_per_split),
                in_specs=[pl.BlockSpec((tile_n, C_pad), row_block), t_spec],
                out_specs=(
                    pl.BlockSpec((8, C_pad), out_block),
                    pl.BlockSpec((8, C_pad), out_block),
                ),
            ),
            compiler_params=pltpu.CompilerParams(
                dimension_semantics=dim_sems,
                vmem_limit_bytes=int(vmem_cap),
            ),
        )(x, t)

    # Attempt order: on v7x try CORE_PARALLEL first (genuine 2-TC sharding of
    # the splits axis), then plain "parallel"; lane-major target first, then
    # the proven sublane-major layout.  Fallbacks only fire on a compile /
    # lowering error (eager dispatch compiles synchronously).
    attempts = []
    if two_cores and num_splits > 1:
        attempts.append(((pltpu.CORE_PARALLEL, pltpu.ARBITRARY), True))
        attempts.append(((pltpu.CORE_PARALLEL, pltpu.ARBITRARY), False))
    attempts.append((("parallel", "arbitrary"), True))
    attempts.append((("parallel", "arbitrary"), False))   # known-good baseline

    inter_out = union_out = None
    err = None
    for dim_sems, lane_major in attempts:
        try:
            inter_out, union_out = run(dim_sems, lane_major)
            break
        except Exception as e:   # retry with a safer, proven configuration
            err = e
    if inter_out is None:
        raise err

    # Tiny final combine in the wrapper: sum split partials, ratio, mean over
    # the true C (padded classes were excluded by the slice).
    inter = jnp.sum(inter_out[0::8, :C], axis=0)   # (C,)
    union = jnp.sum(union_out[0::8, :C], axis=0)   # (C,)
    return -jnp.mean(inter / (union + 1e-8))


def miou_loss_ref(inputs, target):
    """Plain-JAX reference mirroring the PyTorch module."""
    N, C = inputs.shape
    onehot = jax.nn.one_hot(target, C, dtype=jnp.float32)
    p = jax.nn.softmax(inputs.astype(jnp.float32), axis=-1)
    inter = jnp.sum(p * onehot, axis=0)
    union = jnp.sum(p + onehot - p * onehot, axis=0)
    return -jnp.mean(inter / (union + 1e-8))


if __name__ == "__main__":
    key = jax.random.PRNGKey(0)
    k1, k2, k3, k4, k5, k6 = jax.random.split(key, 6)

    # (N, C) logits and (N,) integer class ids, as in the module's forward.
    N, C = 32, 16
    inputs = jax.random.normal(k1, (N, C), dtype=jnp.float32)
    target = jax.random.randint(k2, (N,), 0, C, dtype=jnp.int32)
    loss = miou_loss(inputs, target)
    jax.block_until_ready(loss)
    ref = miou_loss_ref(inputs, target)
    assert jnp.allclose(loss, ref, atol=1e-5, rtol=1e-5), (loss, ref)

    # Non-aligned shapes exercise the C->128 / N->tile padding paths.
    N2, C2 = 37, 21
    inputs2 = jax.random.normal(k3, (N2, C2), dtype=jnp.float32)
    target2 = jax.random.randint(k4, (N2,), 0, C2, dtype=jnp.int32)
    loss2 = miou_loss(inputs2, target2)
    jax.block_until_ready(loss2)
    ref2 = miou_loss_ref(inputs2, target2)
    assert jnp.allclose(loss2, ref2, atol=1e-5, rtol=1e-5), (loss2, ref2)

    # bf16 logits exercise the native low-precision input path (math in f32).
    N3, C3 = 40, 10
    inputs3 = jax.random.normal(k5, (N3, C3), dtype=jnp.float32).astype(jnp.bfloat16)
    target3 = jax.random.randint(k6, (N3,), 0, C3, dtype=jnp.int32)
    loss3 = miou_loss(inputs3, target3)
    jax.block_until_ready(loss3)
    ref3 = miou_loss_ref(inputs3.astype(jnp.float32), target3)
    assert jnp.allclose(loss3, ref3, atol=1e-5, rtol=1e-5), (loss3, ref3)

    print("KERNEL_OK")
</pallas_src>

<mosaic_0001>
module attributes {stable_mosaic.version = 11 : i64} {
  func.func @_miou_kernel(%arg0: i32, %arg1: i32, %arg2: memref<128x128xf32, #tpu.memory_space<vmem>>, %arg3: memref<1x128xi32, #tpu.memory_space<vmem>>, %arg4: memref<8x128xf32, #tpu.memory_space<vmem>>, %arg5: memref<8x128xf32, #tpu.memory_space<vmem>>) attributes {dimension_semantics = [#tpu.dimension_semantics<parallel>, #tpu.dimension_semantics<arbitrary>], iteration_bounds = array<i64: 1, 1>, scalar_prefetch = 0 : i64, scratch_operands = 0 : i64, tpu.core_type = #tpu.core_type<tc>, window_params = [{transform_indices = @transform_0, window_bounds = array<i64: 128, 128>}, {transform_indices = @transform_1, window_bounds = array<i64: 1, 128>}, {transform_indices = @transform_2, window_bounds = array<i64: 8, 128>}, {transform_indices = @transform_3, window_bounds = array<i64: 8, 128>}]} {
    %c0_i32 = arith.constant 0 : i32
    %0 = arith.cmpi eq, %arg1, %c0_i32 : i32
    %1 = arith.extui %0 : i1 to i32
    %c0_i32_0 = arith.constant 0 : i32
    %2 = arith.cmpi ne, %1, %c0_i32_0 : i32
    scf.if %2 {
      %cst_17 = arith.constant 0.000000e+00 : f32
      %44 = vector.broadcast %cst_17 : f32 to vector<8x128xf32>
      %c0_18 = arith.constant 0 : index
      %c0_19 = arith.constant 0 : index
      %45 = vector.load %arg4[%c0_18, %c0_19] : memref<8x128xf32, #tpu.memory_space<vmem>>, vector<8x128xf32>
      tpu.vector_store %arg4[%c0_18, %c0_19], %44 {strides = array<i32>} : memref<8x128xf32, #tpu.memory_space<vmem>>, vector<8x128xf32>,
      %cst_20 = arith.constant 0.000000e+00 : f32
      %46 = vector.broadcast %cst_20 : f32 to vector<8x128xf32>
      %c0_21 = arith.constant 0 : index
      %c0_22 = arith.constant 0 : index
      %47 = vector.load %arg5[%c0_21, %c0_22] : memref<8x128xf32, #tpu.memory_space<vmem>>, vector<8x128xf32>
      tpu.vector_store %arg5[%c0_21, %c0_22], %46 {strides = array<i32>} : memref<8x128xf32, #tpu.memory_space<vmem>>, vector<8x128xf32>,
    } else {
    }
    %c0 = arith.constant 0 : index
    %c0_1 = arith.constant 0 : index
    %3 = vector.load %arg2[%c0, %c0_1] : memref<128x128xf32, #tpu.memory_space<vmem>>, vector<128x128xf32>
    %c0_2 = arith.constant 0 : index
    %c0_3 = arith.constant 0 : index
    %4 = vector.load %arg3[%c0_2, %c0_3] : memref<1x128xi32, #tpu.memory_space<vmem>>, vector<1x128xi32>
    %5 = vector.shape_cast %4 : vector<1x128xi32> to vector<128x1xi32>
    %6 = tpu.iota {dimensions = array<i32: 1>} : vector<1x128xi32>
    %7 = vector.broadcast %5 : vector<128x1xi32> to vector<128x128xi32>
    %8 = vector.broadcast %6 : vector<1x128xi32> to vector<128x128xi32>
    %9 = arith.cmpi eq, %7, %8 : vector<128x128xi32>
    %10 = arith.extui %9 : vector<128x128xi1> to vector<128x128xi32>
    %11 = arith.sitofp %10 : vector<128x128xi32> to vector<128x128xf32>
    %c0_i32_4 = arith.constant 0 : i32
    %12 = vector.broadcast %c0_i32_4 : i32 to vector<128x1xi32>
    %13 = arith.cmpi sge, %5, %12 : vector<128x1xi32>
    %14 = arith.extui %13 : vector<128x1xi1> to vector<128x1xi32>
    %15 = arith.sitofp %14 : vector<128x1xi32> to vector<128x1xf32>
    %cst = arith.constant dense<0xFF800000> : vector<128xf32>
    %16 = vector.multi_reduction <maximumf>, %3, %cst [1] : vector<128x128xf32> to vector<128xf32>
    %17 = vector.shape_cast %16 : vector<128xf32> to vector<128x1xf32>
    %18 = vector.broadcast %17 : vector<128x1xf32> to vector<128x128xf32>
    %19 = arith.subf %3, %18 : vector<128x128xf32>
    %20 = math.exp %19 : vector<128x128xf32>
    %cst_5 = arith.constant dense<0.000000e+00> : vector<128xf32>
    %21 = vector.multi_reduction <add>, %20, %cst_5 [1] : vector<128x128xf32> to vector<128xf32>
    %22 = vector.shape_cast %21 : vector<128xf32> to vector<128x1xf32>
    %23 = tpu.reciprocal %22 : vector<128x1xf32> -> vector<128x1xf32>
    %24 = arith.mulf %23, %15 : vector<128x1xf32>
    %25 = vector.broadcast %24 : vector<128x1xf32> to vector<128x128xf32>
    %26 = arith.mulf %20, %25 : vector<128x128xf32>
    %27 = arith.mulf %26, %11 : vector<128x128xf32>
    %cst_6 = arith.constant dense<0.000000e+00> : vector<128xf32>
    %28 = vector.multi_reduction <add>, %27, %cst_6 [0] : vector<128x128xf32> to vector<128xf32>
    %29 = vector.shape_cast %28 : vector<128xf32> to vector<1x128xf32>
    %cst_7 = arith.constant dense<0.000000e+00> : vector<128xf32>
    %30 = vector.multi_reduction <add>, %26, %cst_7 [0] : vector<128x128xf32> to vector<128xf32>
    %31 = vector.shape_cast %30 : vector<128xf32> to vector<1x128xf32>
    %cst_8 = arith.constant dense<0.000000e+00> : vector<128xf32>
    %32 = vector.multi_reduction <add>, %11, %cst_8 [0] : vector<128x128xf32> to vector<128xf32>
    %33 = vector.shape_cast %32 : vector<128xf32> to vector<1x128xf32>
    %34 = arith.addf %31, %33 : vector<1x128xf32>
    %35 = arith.subf %34, %29 : vector<1x128xf32>
    %c0_9 = arith.constant 0 : index
    %c0_10 = arith.constant 0 : index
    %36 = vector.load %arg4[%c0_9, %c0_10] : memref<8x128xf32, #tpu.memory_space<vmem>>, vector<8x128xf32>
    %37 = vector.broadcast %29 : vector<1x128xf32> to vector<8x128xf32>
    %38 = arith.addf %36, %37 : vector<8x128xf32>
    %c0_11 = arith.constant 0 : index
    %c0_12 = arith.constant 0 : index
    %39 = vector.load %arg4[%c0_11, %c0_12] : memref<8x128xf32, #tpu.memory_space<vmem>>, vector<8x128xf32>
    tpu.vector_store %arg4[%c0_11, %c0_12], %38 {strides = array<i32>} : memref<8x128xf32, #tpu.memory_space<vmem>>, vector<8x128xf32>,
    %c0_13 = arith.constant 0 : index
    %c0_14 = arith.constant 0 : index
    %40 = vector.load %arg5[%c0_13, %c0_14] : memref<8x128xf32, #tpu.memory_space<vmem>>, vector<8x128xf32>
    %41 = vector.broadcast %35 : vector<1x128xf32> to vector<8x128xf32>
    %42 = arith.addf %40, %41 : vector<8x128xf32>
    %c0_15 = arith.constant 0 : index
    %c0_16 = arith.constant 0 : index
    %43 = vector.load %arg5[%c0_15, %c0_16] : memref<8x128xf32, #tpu.memory_space<vmem>>, vector<8x128xf32>
    tpu.vector_store %arg5[%c0_15, %c0_16], %42 {strides = array<i32>} : memref<8x128xf32, #tpu.memory_space<vmem>>, vector<8x128xf32>,
    return
  }
  func.func @transform_0(%arg0: i32, %arg1: i32) -> (i32, i32) {
    %c1_i32 = arith.constant 1 : i32
    %0 = arith.muli %arg0, %c1_i32 : i32
    %1 = arith.addi %0, %arg1 : i32
    %c0_i32 = arith.constant 0 : i32
    %c0_i32_0 = arith.constant 0 : i32
    return %1, %c0_i32 : i32, i32
  }
  func.func @transform_1(%arg0: i32, %arg1: i32) -> (i32, i32) {
    %c1_i32 = arith.constant 1 : i32
    %0 = arith.muli %arg0, %c1_i32 : i32
    %1 = arith.addi %0, %arg1 : i32
    %c0_i32 = arith.constant 0 : i32
    %c0_i32_0 = arith.constant 0 : i32
    return %c0_i32, %1 : i32, i32
  }
  func.func @transform_2(%arg0: i32, %arg1: i32) -> (i32, i32) {
    %c0_i32 = arith.constant 0 : i32
    %c0_i32_0 = arith.constant 0 : i32
    return %arg0, %c0_i32 : i32, i32
  }
  func.func @transform_3(%arg0: i32, %arg1: i32) -> (i32, i32) {
    %c0_i32 = arith.constant 0 : i32
    %c0_i32_0 = arith.constant 0 : i32
    return %arg0, %c0_i32 : i32, i32
  }
}

module attributes {stable_mosaic.version = 11 : i64} {
  func.func @_miou_kernel(%arg0: i32, %arg1: i32, %arg2: memref<128x128xf32, #tpu.memory_space<vmem>>, %arg3: memref<128x1xi32, #tpu.memory_space<vmem>>, %arg4: memref<8x128xf32, #tpu.memory_space<vmem>>, %arg5: memref<8x128xf32, #tpu.memory_space<vmem>>) attributes {dimension_semantics = [#tpu.dimension_semantics<parallel>, #tpu.dimension_semantics<arbitrary>], iteration_bounds = array<i64: 1, 1>, scalar_prefetch = 0 : i64, scratch_operands = 0 : i64, tpu.core_type = #tpu.core_type<tc>, window_params = [{transform_indices = @transform_0, window_bounds = array<i64: 128, 128>}, {transform_indices = @transform_1, window_bounds = array<i64: 128, 1>}, {transform_indices = @transform_2, window_bounds = array<i64: 8, 128>}, {transform_indices = @transform_3, window_bounds = array<i64: 8, 128>}]} {
    %c0_i32 = arith.constant 0 : i32
    %0 = arith.cmpi eq, %arg1, %c0_i32 : i32
    %1 = arith.extui %0 : i1 to i32
    %c0_i32_0 = arith.constant 0 : i32
    %2 = arith.cmpi ne, %1, %c0_i32_0 : i32
    scf.if %2 {
      %cst_17 = arith.constant 0.000000e+00 : f32
      %43 = vector.broadcast %cst_17 : f32 to vector<8x128xf32>
      %c0_18 = arith.constant 0 : index
      %c0_19 = arith.constant 0 : index
      %44 = vector.load %arg4[%c0_18, %c0_19] : memref<8x128xf32, #tpu.memory_space<vmem>>, vector<8x128xf32>
      tpu.vector_store %arg4[%c0_18, %c0_19], %43 {strides = array<i32>} : memref<8x128xf32, #tpu.memory_space<vmem>>, vector<8x128xf32>,
      %cst_20 = arith.constant 0.000000e+00 : f32
      %45 = vector.broadcast %cst_20 : f32 to vector<8x128xf32>
      %c0_21 = arith.constant 0 : index
      %c0_22 = arith.constant 0 : index
      %46 = vector.load %arg5[%c0_21, %c0_22] : memref<8x128xf32, #tpu.memory_space<vmem>>, vector<8x128xf32>
      tpu.vector_store %arg5[%c0_21, %c0_22], %45 {strides = array<i32>} : memref<8x128xf32, #tpu.memory_space<vmem>>, vector<8x128xf32>,
    } else {
    }
    %c0 = arith.constant 0 : index
    %c0_1 = arith.constant 0 : index
    %3 = vector.load %arg2[%c0, %c0_1] : memref<128x128xf32, #tpu.memory_space<vmem>>, vector<128x128xf32>
    %c0_2 = arith.constant 0 : index
    %c0_3 = arith.constant 0 : index
    %4 = vector.load %arg3[%c0_2, %c0_3] : memref<128x1xi32, #tpu.memory_space<vmem>>, vector<128x1xi32>
    %5 = tpu.iota {dimensions = array<i32: 1>} : vector<1x128xi32>
    %6 = vector.broadcast %4 : vector<128x1xi32> to vector<128x128xi32>
    %7 = vector.broadcast %5 : vector<1x128xi32> to vector<128x128xi32>
    %8 = arith.cmpi eq, %6, %7 : vector<128x128xi32>
    %9 = arith.extui %8 : vector<128x128xi1> to vector<128x128xi32>
    %10 = arith.sitofp %9 : vector<128x128xi32> to vector<128x128xf32>
    %c0_i32_4 = arith.constant 0 : i32
    %11 = vector.broadcast %c0_i32_4 : i32 to vector<128x1xi32>
    %12 = arith.cmpi sge, %4, %11 : vector<128x1xi32>
    %13 = arith.extui %12 : vector<128x1xi1> to vector<128x1xi32>
    %14 = arith.sitofp %13 : vector<128x1xi32> to vector<128x1xf32>
    %cst = arith.constant dense<0xFF800000> : vector<128xf32>
    %15 = vector.multi_reduction <maximumf>, %3, %cst [1] : vector<128x128xf32> to vector<128xf32>
    %16 = vector.shape_cast %15 : vector<128xf32> to vector<128x1xf32>
    %17 = vector.broadcast %16 : vector<128x1xf32> to vector<128x128xf32>
    %18 = arith.subf %3, %17 : vector<128x128xf32>
    %19 = math.exp %18 : vector<128x128xf32>
    %cst_5 = arith.constant dense<0.000000e+00> : vector<128xf32>
    %20 = vector.multi_reduction <add>, %19, %cst_5 [1] : vector<128x128xf32> to vector<128xf32>
    %21 = vector.shape_cast %20 : vector<128xf32> to vector<128x1xf32>
    %22 = tpu.reciprocal %21 : vector<128x1xf32> -> vector<128x1xf32>
    %23 = arith.mulf %22, %14 : vector<128x1xf32>
    %24 = vector.broadcast %23 : vector<128x1xf32> to vector<128x128xf32>
    %25 = arith.mulf %19, %24 : vector<128x128xf32>
    %26 = arith.mulf %25, %10 : vector<128x128xf32>
    %cst_6 = arith.constant dense<0.000000e+00> : vector<128xf32>
    %27 = vector.multi_reduction <add>, %26, %cst_6 [0] : vector<128x128xf32> to vector<128xf32>
    %28 = vector.shape_cast %27 : vector<128xf32> to vector<1x128xf32>
    %cst_7 = arith.constant dense<0.000000e+00> : vector<128xf32>
    %29 = vector.multi_reduction <add>, %25, %cst_7 [0] : vector<128x128xf32> to vector<128xf32>
    %30 = vector.shape_cast %29 : vector<128xf32> to vector<1x128xf32>
    %cst_8 = arith.constant dense<0.000000e+00> : vector<128xf32>
    %31 = vector.multi_reduction <add>, %10, %cst_8 [0] : vector<128x128xf32> to vector<128xf32>
    %32 = vector.shape_cast %31 : vector<128xf32> to vector<1x128xf32>
    %33 = arith.addf %30, %32 : vector<1x128xf32>
    %34 = arith.subf %33, %28 : vector<1x128xf32>
    %c0_9 = arith.constant 0 : index
    %c0_10 = arith.constant 0 : index
    %35 = vector.load %arg4[%c0_9, %c0_10] : memref<8x128xf32, #tpu.memory_space<vmem>>, vector<8x128xf32>
    %36 = vector.broadcast %28 : vector<1x128xf32> to vector<8x128xf32>
    %37 = arith.addf %35, %36 : vector<8x128xf32>
    %c0_11 = arith.constant 0 : index
    %c0_12 = arith.constant 0 : index
    %38 = vector.load %arg4[%c0_11, %c0_12] : memref<8x128xf32, #tpu.memory_space<vmem>>, vector<8x128xf32>
    tpu.vector_store %arg4[%c0_11, %c0_12], %37 {strides = array<i32>} : memref<8x128xf32, #tpu.memory_space<vmem>>, vector<8x128xf32>,
    %c0_13 = arith.constant 0 : index
    %c0_14 = arith.constant 0 : index
    %39 = vector.load %arg5[%c0_13, %c0_14] : memref<8x128xf32, #tpu.memory_space<vmem>>, vector<8x128xf32>
    %40 = vector.broadcast %34 : vector<1x128xf32> to vector<8x128xf32>
    %41 = arith.addf %39, %40 : vector<8x128xf32>
    %c0_15 = arith.constant 0 : index
    %c0_16 = arith.constant 0 : index
    %42 = vector.load %arg5[%c0_15, %c0_16] : memref<8x128xf32, #tpu.memory_space<vmem>>, vector<8x128xf32>
    tpu.vector_store %arg5[%c0_15, %c0_16], %41 {strides = array<i32>} : memref<8x128xf32, #tpu.memory_space<vmem>>, vector<8x128xf32>,
    return
  }
  func.func @transform_0(%arg0: i32, %arg1: i32) -> (i32, i32) {
    %c1_i32 = arith.constant 1 : i32
    %0 = arith.muli %arg0, %c1_i32 : i32
    %1 = arith.addi %0, %arg1 : i32
    %c0_i32 = arith.constant 0 : i32
    %c0_i32_0 = arith.constant 0 : i32
    return %1, %c0_i32 : i32, i32
  }
  func.func @transform_1(%arg0: i32, %arg1: i32) -> (i32, i32) {
    %c1_i32 = arith.constant 1 : i32
    %0 = arith.muli %arg0, %c1_i32 : i32
    %1 = arith.addi %0, %arg1 : i32
    %c0_i32 = arith.constant 0 : i32
    %c0_i32_0 = arith.constant 0 : i32
    return %1, %c0_i32 : i32, i32
  }
  func.func @transform_2(%arg0: i32, %arg1: i32) -> (i32, i32) {
    %c0_i32 = arith.constant 0 : i32
    %c0_i32_0 = arith.constant 0 : i32
    return %arg0, %c0_i32 : i32, i32
  }
  func.func @transform_3(%arg0: i32, %arg1: i32) -> (i32, i32) {
    %c0_i32 = arith.constant 0 : i32
    %c0_i32_0 = arith.constant 0 : i32
    return %arg0, %c0_i32 : i32, i32
  }
}

</mosaic_0001>

<llo_original>
// kernel: tpu_custom_call.1
$region0: #{tpu_custom_call.1}
  #allocation0 [shape = 'u32[]', space=smem, size = 0x4, offset = 0x4, fixed_abs, tag = 'smem constant byte address 0x4 - core index']
  #allocation1 [shape = 'u32[144,128]{1,0:T(1,128)}', space=vmem, size = 0x12000, scoped, tag = 'internal scratch']
  %s0 = inlined_call_operand.hbm [shape: f32[128,128], index: 0, kind: input, shape index: {}]
  %s1 = inlined_call_operand.vmem [shape: s32[1,128], index: 1, kind: input, shape index: {}]
  %s2 = inlined_call_operand.hbm [shape: f32[8,128], index: 2, kind: output, shape index: {0}]
  %s3 = inlined_call_operand.hbm [shape: f32[8,128], index: 3, kind: output, shape index: {1}]
  %4 = xla_tuple %s2, %s3
  %s5 = sld [smem:[#allocation0]]
  $region34: #{tpu_custom_call.1} parent=0
    _
  %s7 = ssub.s32 1, %s5
  %s8 = scalar_select 0, %s7, %s5
  $region1: #{tpu_custom_call.1} parent=0
    #allocation2 [shape = 'u8[65536]{0}', space=vmem, size = 0x10000, scoped, tag = 'input window, operand 0, single buffered']
    #allocation3 [shape = 's32[1]{0}', space=sflag, size = 0x4, scoped, tag = 'scoped memory for tpu_custom_call.1']
    #allocation4 [shape = 's32[1]{0}', space=sflag, size = 0x4, scoped, tag = 'scoped memory for tpu_custom_call.1']
    #allocation5 [shape = 'u8[4096]{0}', space=vmem, size = 0x1000, scoped, tag = 'output window, operand 0, single buffered']
    #allocation6 [shape = 'u8[4096]{0}', space=vmem, size = 0x1000, scoped, tag = 'output window, operand 1, single buffered']
    #allocation7 [shape = 's32[1]{0}', space=sflag, size = 0x4, scoped, tag = 'scoped memory for tpu_custom_call.1']
    %9 = vsyncpa [#allocation3], 0
    %10 = vsyncpa [#allocation4], 0
    %11 = vsyncpa [#allocation7], 0
    // Predicated region
    $region2: #{tpu_custom_call.1} parent=1 // pred_check
      _
    $region3: #{tpu_custom_call.1} parent=1 // pred_check_branch
      %13 = sbr.rel (0) target = $region5
    $region4: #{tpu_custom_call.1} parent=1 // pred_region
      %s14 = sadd.s32 0, 0
      %s15 = smul.u32 16, %s14
      %s17 = ssub.s32 2048, 2048
      %18 = vsyncadd [#allocation3], %s17
      %s19 = smul.addr %s15, 128
      %s20 = scalar_lea.hbm %s0, %s19
      %s21 = sshll.u32 [#allocation2], 4
      %s22 = int_to_ptr.vmem [resolvable:$true] %s21
      %27 = dma.hbm_to_vmem [thread:$0]  %s20, 2048, %s22, [#allocation3], 128, 128, 8
    $region5: #{tpu_custom_call.1} parent=1 // pred_fallthru
      _
    // Predicated region
    $region6: #{tpu_custom_call.1} parent=1 // pred_check
      _
    $region7: #{tpu_custom_call.1} parent=1 // pred_check_branch
      %29 = sbr.rel (0) target = $region9
    $region8: #{tpu_custom_call.1} parent=1 // pred_region
      %s30 = sadd.s32 0, 0
      %p31 = scmp.lt.s32.totalorder %s30, 0
      %s32 = scalar_select %p31, %s30, 0
      %s33 = scalar_lea.vmem %s1, %s32
      %s34 = sadd.s32 0, 0
    $region9: #{tpu_custom_call.1} parent=1 // pred_fallthru
      _
    // Predicated region
    $region10: #{tpu_custom_call.1} parent=1 // pred_check
      _
    $region11: #{tpu_custom_call.1} parent=1 // pred_check_branch
      %36 = sbr.rel (0) target = $region13
    $region12: #{tpu_custom_call.1} parent=1 // pred_region
      %37 = dma.done [#allocation3], 2048
    $region13: #{tpu_custom_call.1} parent=1 // pred_fallthru
      _
    %s38 = sadd.s32 0, 0
    %p39 = scmp.lt.s32.totalorder %s38, 0
    %s40 = scalar_select %p39, %s38, 0
    %s41 = scalar_lea.vmem %s1, %s40
    %s42 = sadd.s32 0, 0
    %s43 = smul.u32 16, %s42
    %s44 = sadd.s32 0, 0
    %p45 = scmp.lt.s32.totalorder %s44, 0
    %s46 = scalar_select %p45, %s44, 0
    %s47 = scalar_lea.vmem %s1, %s46
    %s48 = sadd.s32 0, 0
    %p49 = scmp.eq.s32.totalorder 0, 0
    // Predicated region
    $region14: #{tpu_custom_call.1} parent=1 // pred_check
      %p50 = pneg %p49
    $region15: #{tpu_custom_call.1} parent=1 // pred_check_branch
      %52 = sbr.rel (%p50) target = $region17
    $region16: #{tpu_custom_call.1} parent=1 // pred_region
      %53 = vst [vmem:[#allocation5] sm:$0xff] 0.0
      %54 = vst [vmem:[#allocation6] sm:$0xff] 0.0
    $region17: #{tpu_custom_call.1} parent=1 // pred_fallthru
      _
    %v55 = vld [vmem:[#allocation2] sm:$0xff]
    %v56 = vld [vmem:[#allocation2 + $0x8] sm:$0xff]
    %v57 = vld [vmem:[#allocation2 + $0x10] sm:$0xff]
    %v58 = vld [vmem:[#allocation2 + $0x18] sm:$0xff]
    %v59 = vld [vmem:[#allocation2 + $0x20] sm:$0xff]
    %v60 = vld [vmem:[#allocation2 + $0x28] sm:$0xff]
    %v61 = vld [vmem:[#allocation2 + $0x30] sm:$0xff]
    %v62 = vld [vmem:[#allocation2 + $0x38] sm:$0xff]
    %v63 = vld [vmem:[#allocation2 + $0x40] sm:$0xff]
    %v64 = vld [vmem:[#allocation2 + $0x48] sm:$0xff]
    %v65 = vld [vmem:[#allocation2 + $0x50] sm:$0xff]
    %v66 = vld [vmem:[#allocation2 + $0x58] sm:$0xff]
    %v67 = vld [vmem:[#allocation2 + $0x60] sm:$0xff]
    %v68 = vld [vmem:[#allocation2 + $0x68] sm:$0xff]
    %v69 = vld [vmem:[#allocation2 + $0x70] sm:$0xff]
    %v70 = vld [vmem:[#allocation2 + $0x78] sm:$0xff]
    %v71 = vld [vmem:[%s47] sm:$0x1]
    %v72 = vlaneseq
    %v73 = vshrl.u32 %v72, 7
    %v74 = vsub.s32 0, %v73
    %v75 = vrot.slane %v71, %v74
    %77 = vbcast.lane.b32.xlu0 %v75, 256
    %v78 = vpop.permute.xlu0 %77
    %s80 = sor.u32 256, 8
    %81 = vbcast.lane.b32.xlu0 %v75, %s80
    %v82 = vpop.permute.xlu0 %81
    %s84 = sor.u32 256, 16
    %85 = vbcast.lane.b32.xlu0 %v75, %s84
    %v86 = vpop.permute.xlu0 %85
    %s88 = sor.u32 256, 24
    %89 = vbcast.lane.b32.xlu0 %v75, %s88
    %v90 = vpop.permute.xlu0 %89
    %s92 = sor.u32 256, 32
    %93 = vbcast.lane.b32.xlu0 %v75, %s92
    %v94 = vpop.permute.xlu0 %93
    %s96 = sor.u32 256, 40
    %97 = vbcast.lane.b32.xlu0 %v75, %s96
    %v98 = vpop.permute.xlu0 %97
    %s100 = sor.u32 256, 48
    %101 = vbcast.lane.b32.xlu0 %v75, %s100
    %v102 = vpop.permute.xlu0 %101
    %s104 = sor.u32 256, 56
    %105 = vbcast.lane.b32.xlu0 %v75, %s104
    %v106 = vpop.permute.xlu0 %105
    %s108 = sor.u32 256, 64
    %109 = vbcast.lane.b32.xlu0 %v75, %s108
    %v110 = vpop.permute.xlu0 %109
    %s112 = sor.u32 256, 72
    %113 = vbcast.lane.b32.xlu0 %v75, %s112
    %v114 = vpop.permute.xlu0 %113
    %s116 = sor.u32 256, 80
    %117 = vbcast.lane.b32.xlu0 %v75, %s116
    %v118 = vpop.permute.xlu0 %117
    %s120 = sor.u32 256, 88
    %121 = vbcast.lane.b32.xlu0 %v75, %s120
    %v122 = vpop.permute.xlu0 %121
    %s124 = sor.u32 256, 96
    %125 = vbcast.lane.b32.xlu0 %v75, %s124
    %v126 = vpop.permute.xlu0 %125
    %s128 = sor.u32 256, 104
    %129 = vbcast.lane.b32.xlu0 %v75, %s128
    %v130 = vpop.permute.xlu0 %129
    %s132 = sor.u32 256, 112
    %133 = vbcast.lane.b32.xlu0 %v75, %s132
    %v134 = vpop.permute.xlu0 %133
    %s136 = sor.u32 256, 120
    %137 = vbcast.lane.b32.xlu0 %v75, %s136
    %v138 = vpop.permute.xlu0 %137
    %v139 = vlaneseq
    %v140 = vand.u32 %v139, 127
    %vm141 = vcmp.eq.s32.totalorder %v78, %v140
    %vm142 = vcmp.eq.s32.totalorder %v82, %v140
    %vm143 = vcmp.eq.s32.totalorder %v86, %v140
    %vm144 = vcmp.eq.s32.totalorder %v90, %v140
    %vm145 = vcmp.eq.s32.totalorder %v94, %v140
    %vm146 = vcmp.eq.s32.totalorder %v98, %v140
    %vm147 = vcmp.eq.s32.totalorder %v102, %v140
    %vm148 = vcmp.eq.s32.totalorder %v106, %v140
    %vm149 = vcmp.eq.s32.totalorder %v110, %v140
    %vm150 = vcmp.eq.s32.totalorder %v114, %v140
    %vm151 = vcmp.eq.s32.totalorder %v118, %v140
    %vm152 = vcmp.eq.s32.totalorder %v122, %v140
    %vm153 = vcmp.eq.s32.totalorder %v126, %v140
    %vm154 = vcmp.eq.s32.totalorder %v130, %v140
    %vm155 = vcmp.eq.s32.totalorder %v134, %v140
    %vm156 = vcmp.eq.s32.totalorder %v138, %v140
    %v157 = vsel %vm141, 1, 0
    %v158 = vsel %vm142, 1, 0
    %v159 = vsel %vm143, 1, 0
    %v160 = vsel %vm144, 1, 0
    %v161 = vsel %vm145, 1, 0
    %v162 = vsel %vm146, 1, 0
    %v163 = vsel %vm147, 1, 0
    %v164 = vsel %vm148, 1, 0
    %v165 = vsel %vm149, 1, 0
    %v166 = vsel %vm150, 1, 0
    %v167 = vsel %vm151, 1, 0
    %v168 = vsel %vm152, 1, 0
    %v169 = vsel %vm153, 1, 0
    %v170 = vsel %vm154, 1, 0
    %v171 = vsel %vm155, 1, 0
    %v172 = vsel %vm156, 1, 0
    %v173 = vcvt.s32.f32 %v157
    %v174 = vcvt.s32.f32 %v158
    %v175 = vcvt.s32.f32 %v159
    %v176 = vcvt.s32.f32 %v160
    %v177 = vcvt.s32.f32 %v161
    %v178 = vcvt.s32.f32 %v162
    %v179 = vcvt.s32.f32 %v163
    %v180 = vcvt.s32.f32 %v164
    %v181 = vcvt.s32.f32 %v165
    %v182 = vcvt.s32.f32 %v166
    %v183 = vcvt.s32.f32 %v167
    %v184 = vcvt.s32.f32 %v168
    %v185 = vcvt.s32.f32 %v169
    %v186 = vcvt.s32.f32 %v170
    %v187 = vcvt.s32.f32 %v171
    %v188 = vcvt.s32.f32 %v172
    %vm189 = vcmp.ge.s32.totalorder %v78, 0
    %vm190 = vcmp.ge.s32.totalorder %v82, 0
    %vm191 = vcmp.ge.s32.totalorder %v86, 0
    %vm192 = vcmp.ge.s32.totalorder %v90, 0
    %vm193 = vcmp.ge.s32.totalorder %v94, 0
    %vm194 = vcmp.ge.s32.totalorder %v98, 0
    %vm195 = vcmp.ge.s32.totalorder %v102, 0
    %vm196 = vcmp.ge.s32.totalorder %v106, 0
    %vm197 = vcmp.ge.s32.totalorder %v110, 0
    %vm198 = vcmp.ge.s32.totalorder %v114, 0
    %vm199 = vcmp.ge.s32.totalorder %v118, 0
    %vm200 = vcmp.ge.s32.totalorder %v122, 0
    %vm201 = vcmp.ge.s32.totalorder %v126, 0
    %vm202 = vcmp.ge.s32.totalorder %v130, 0
    %vm203 = vcmp.ge.s32.totalorder %v134, 0
    %vm204 = vcmp.ge.s32.totalorder %v138, 0
    %v205 = vsel %vm189, 1, 0
    %v206 = vsel %vm190, 1, 0
    %v207 = vsel %vm191, 1, 0
    %v208 = vsel %vm192, 1, 0
    %v209 = vsel %vm193, 1, 0
    %v210 = vsel %vm194, 1, 0
    %v211 = vsel %vm195, 1, 0
    %v212 = vsel %vm196, 1, 0
    %v213 = vsel %vm197, 1, 0
    %v214 = vsel %vm198, 1, 0
    %v215 = vsel %vm199, 1, 0
    %v216 = vsel %vm200, 1, 0
    %v217 = vsel %vm201, 1, 0
    %v218 = vsel %vm202, 1, 0
    %v219 = vsel %vm203, 1, 0
    %v220 = vsel %vm204, 1, 0
    %v221 = vcvt.s32.f32 %v205
    %v222 = vcvt.s32.f32 %v206
    %v223 = vcvt.s32.f32 %v207
    %v224 = vcvt.s32.f32 %v208
    %v225 = vcvt.s32.f32 %v209
    %v226 = vcvt.s32.f32 %v210
    %v227 = vcvt.s32.f32 %v211
    %v228 = vcvt.s32.f32 %v212
    %v229 = vcvt.s32.f32 %v213
    %v230 = vcvt.s32.f32 %v214
    %v231 = vcvt.s32.f32 %v215
    %v232 = vcvt.s32.f32 %v216
    %v233 = vcvt.s32.f32 %v217
    %v234 = vcvt.s32.f32 %v218
    %v235 = vcvt.s32.f32 %v219
    %v236 = vcvt.s32.f32 %v220
    %237 = vmax.xlane.f32.xlu0 %v55
    %v238 = vpop.xlane.xlu0 %237
    %239 = vmax.xlane.f32.xlu0 %v56
    %v240 = vpop.xlane.xlu0 %239
    %241 = vmax.xlane.f32.xlu0 %v57
    %v242 = vpop.xlane.xlu0 %241
    %243 = vmax.xlane.f32.xlu0 %v58
    %v244 = vpop.xlane.xlu0 %243
    %245 = vmax.xlane.f32.xlu0 %v59
    %v246 = vpop.xlane.xlu0 %245
    %247 = vmax.xlane.f32.xlu0 %v60
    %v248 = vpop.xlane.xlu0 %247
    %249 = vmax.xlane.f32.xlu0 %v61
    %v250 = vpop.xlane.xlu0 %249
    %251 = vmax.xlane.f32.xlu0 %v62
    %v252 = vpop.xlane.xlu0 %251
    %253 = vmax.xlane.f32.xlu0 %v63
    %v254 = vpop.xlane.xlu0 %253
    %255 = vmax.xlane.f32.xlu0 %v64
    %v256 = vpop.xlane.xlu0 %255
    %257 = vmax.xlane.f32.xlu0 %v65
    %v258 = vpop.xlane.xlu0 %257
    %259 = vmax.xlane.f32.xlu0 %v66
    %v260 = vpop.xlane.xlu0 %259
    %261 = vmax.xlane.f32.xlu0 %v67
    %v262 = vpop.xlane.xlu0 %261
    %263 = vmax.xlane.f32.xlu0 %v68
    %v264 = vpop.xlane.xlu0 %263
    %265 = vmax.xlane.f32.xlu0 %v69
    %v266 = vpop.xlane.xlu0 %265
    %267 = vmax.xlane.f32.xlu0 %v70
    %v268 = vpop.xlane.xlu0 %267
    %v269 = vsub.f32 %v55, %v238
    %v270 = vsub.f32 %v56, %v240
    %v271 = vsub.f32 %v57, %v242
    %v272 = vsub.f32 %v58, %v244
    %v273 = vsub.f32 %v59, %v246
    %v274 = vsub.f32 %v60, %v248
    %v275 = vsub.f32 %v61, %v250
    %v276 = vsub.f32 %v62, %v252
    %v277 = vsub.f32 %v63, %v254
    %v278 = vsub.f32 %v64, %v256
    %v279 = vsub.f32 %v65, %v258
    %v280 = vsub.f32 %v66, %v260
    %v281 = vsub.f32 %v67, %v262
    %v282 = vsub.f32 %v68, %v264
    %v283 = vsub.f32 %v69, %v266
    %v284 = vsub.f32 %v70, %v268
    %v285 = vmul.f32 %v269, 1.442695
    %v286 = vpow.pop %v285
    %v287 = vmul.f32 %v270, 1.442695
    %v288 = vpow.pop %v287
    %v289 = vmul.f32 %v271, 1.442695
    %v290 = vpow.pop %v289
    %v291 = vmul.f32 %v272, 1.442695
    %v292 = vpow.pop %v291
    %v293 = vmul.f32 %v273, 1.442695
    %v294 = vpow.pop %v293
    %v295 = vmul.f32 %v274, 1.442695
    %v296 = vpow.pop %v295
    %v297 = vmul.f32 %v275, 1.442695
    %v298 = vpow.pop %v297
    %v299 = vmul.f32 %v276, 1.442695
    %v300 = vpow.pop %v299
    %v301 = vmul.f32 %v277, 1.442695
    %v302 = vpow.pop %v301
    %v303 = vmul.f32 %v278, 1.442695
    %v304 = vpow.pop %v303
    %v305 = vmul.f32 %v279, 1.442695
    %v306 = vpow.pop %v305
    %v307 = vmul.f32 %v280, 1.442695
    %v308 = vpow.pop %v307
    %v309 = vmul.f32 %v281, 1.442695
    %v310 = vpow.pop %v309
    %v311 = vmul.f32 %v282, 1.442695
    %v312 = vpow.pop %v311
    %v313 = vmul.f32 %v283, 1.442695
    %v314 = vpow.pop %v313
    %v315 = vmul.f32 %v284, 1.442695
    %v316 = vpow.pop %v315
    %317 = vadd.xlane.f32.xlu0 %v286
    %v318 = vpop.xlane.xlu0 %317
    %319 = vadd.xlane.f32.xlu0 %v288
    %v320 = vpop.xlane.xlu0 %319
    %321 = vadd.xlane.f32.xlu0 %v290
    %v322 = vpop.xlane.xlu0 %321
    %323 = vadd.xlane.f32.xlu0 %v292
    %v324 = vpop.xlane.xlu0 %323
    %325 = vadd.xlane.f32.xlu0 %v294
    %v326 = vpop.xlane.xlu0 %325
    %327 = vadd.xlane.f32.xlu0 %v296
    %v328 = vpop.xlane.xlu0 %327
    %329 = vadd.xlane.f32.xlu0 %v298
    %v330 = vpop.xlane.xlu0 %329
    %331 = vadd.xlane.f32.xlu0 %v300
    %v332 = vpop.xlane.xlu0 %331
    %333 = vadd.xlane.f32.xlu0 %v302
    %v334 = vpop.xlane.xlu0 %333
    %335 = vadd.xlane.f32.xlu0 %v304
    %v336 = vpop.xlane.xlu0 %335
    %337 = vadd.xlane.f32.xlu0 %v306
    %v338 = vpop.xlane.xlu0 %337
    %339 = vadd.xlane.f32.xlu0 %v308
    %v340 = vpop.xlane.xlu0 %339
    %341 = vadd.xlane.f32.xlu0 %v310
    %v342 = vpop.xlane.xlu0 %341
    %343 = vadd.xlane.f32.xlu0 %v312
    %v344 = vpop.xlane.xlu0 %343
    %345 = vadd.xlane.f32.xlu0 %v314
    %v346 = vpop.xlane.xlu0 %345
    %347 = vadd.xlane.f32.xlu0 %v316
    %v348 = vpop.xlane.xlu0 %347
    %v349 = vrcp.pop %v318
    %v350 = vrcp.pop %v320
    %v351 = vrcp.pop %v322
    %v352 = vrcp.pop %v324
    %v353 = vrcp.pop %v326
    %v354 = vrcp.pop %v328
    %v355 = vrcp.pop %v330
    %v356 = vrcp.pop %v332
    %v357 = vrcp.pop %v334
    %v358 = vrcp.pop %v336
    %v359 = vrcp.pop %v338
    %v360 = vrcp.pop %v340
    %v361 = vrcp.pop %v342
    %v362 = vrcp.pop %v344
    %v363 = vrcp.pop %v346
    %v364 = vrcp.pop %v348
    %v365 = vmul.f32 %v349, %v221
    %v366 = vmul.f32 %v350, %v222
    %v367 = vmul.f32 %v351, %v223
    %v368 = vmul.f32 %v352, %v224
    %v369 = vmul.f32 %v353, %v225
    %v370 = vmul.f32 %v354, %v226
    %v371 = vmul.f32 %v355, %v227
    %v372 = vmul.f32 %v356, %v228
    %v373 = vmul.f32 %v357, %v229
    %v374 = vmul.f32 %v358, %v230
    %v375 = vmul.f32 %v359, %v231
    %v376 = vmul.f32 %v360, %v232
    %v377 = vmul.f32 %v361, %v233
    %v378 = vmul.f32 %v362, %v234
    %v379 = vmul.f32 %v363, %v235
    %v380 = vmul.f32 %v364, %v236
    %v381 = vmul.f32 %v286, %v365
    %v382 = vmul.f32 %v288, %v366
    %v383 = vmul.f32 %v290, %v367
    %v384 = vmul.f32 %v292, %v368
    %v385 = vmul.f32 %v294, %v369
    %v386 = vmul.f32 %v296, %v370
    %v387 = vmul.f32 %v298, %v371
    %v388 = vmul.f32 %v300, %v372
    %v389 = vmul.f32 %v302, %v373
    %v390 = vmul.f32 %v304, %v374
    %v391 = vmul.f32 %v306, %v375
    %v392 = vmul.f32 %v308, %v376
    %v393 = vmul.f32 %v310, %v377
    %v394 = vmul.f32 %v312, %v378
    %v395 = vmul.f32 %v314, %v379
    %v396 = vmul.f32 %v316, %v380
    %v397 = vmul.f32 %v381, %v173
    %v398 = vmul.f32 %v382, %v174
    %v399 = vmul.f32 %v383, %v175
    %v400 = vmul.f32 %v384, %v176
    %v401 = vmul.f32 %v385, %v177
    %v402 = vmul.f32 %v386, %v178
    %v403 = vmul.f32 %v387, %v179
    %v404 = vmul.f32 %v388, %v180
    %v405 = vmul.f32 %v389, %v181
    %v406 = vmul.f32 %v390, %v182
    %v407 = vmul.f32 %v391, %v183
    %v408 = vmul.f32 %v392, %v184
    %v409 = vmul.f32 %v393, %v185
    %v410 = vmul.f32 %v394, %v186
    %v411 = vmul.f32 %v395, %v187
    %v412 = vmul.f32 %v396, %v188
    %v413 = vadd.f32 %v397, %v398
    %v414 = vadd.f32 %v413, %v399
    %v415 = vadd.f32 %v414, %v400
    %v416 = vadd.f32 %v415, %v401
    %v417 = vadd.f32 %v416, %v402
    %v418 = vadd.f32 %v417, %v403
    %v419 = vadd.f32 %v418, %v404
    %v420 = vadd.f32 %v419, %v405
    %v421 = vadd.f32 %v420, %v406
    %v422 = vadd.f32 %v421, %v407
    %v423 = vadd.f32 %v422, %v408
    %v424 = vadd.f32 %v423, %v409
    %v425 = vadd.f32 %v424, %v410
    %v426 = vadd.f32 %v425, %v411
    %v427 = vadd.f32 %v426, %v412
    %v428 = vrot.slane %v427, 4
    %v429 = vadd.f32 %v427, %v428
    %v430 = vrot.slane %v429, 2
    %v431 = vadd.f32 %v429, %v430
    %v432 = vrot.slane %v431, 1
    %v433 = vadd.f32 %v431, %v432
    %v434 = vadd.f32 %v381, %v382
    %v435 = vadd.f32 %v434, %v383
    %v436 = vadd.f32 %v435, %v384
    %v437 = vadd.f32 %v436, %v385
    %v438 = vadd.f32 %v437, %v386
    %v439 = vadd.f32 %v438, %v387
    %v440 = vadd.f32 %v439, %v388
    %v441 = vadd.f32 %v440, %v389
    %v442 = vadd.f32 %v441, %v390
    %v443 = vadd.f32 %v442, %v391
    %v444 = vadd.f32 %v443, %v392
    %v445 = vadd.f32 %v444, %v393
    %v446 = vadd.f32 %v445, %v394
    %v447 = vadd.f32 %v446, %v395
    %v448 = vadd.f32 %v447, %v396
    %v449 = vrot.slane %v448, 4
    %v450 = vadd.f32 %v448, %v449
    %v451 = vrot.slane %v450, 2
    %v452 = vadd.f32 %v450, %v451
    %v453 = vrot.slane %v452, 1
    %v454 = vadd.f32 %v452, %v453
    %v455 = vadd.f32 %v173, %v174
    %v456 = vadd.f32 %v455, %v175
    %v457 = vadd.f32 %v456, %v176
    %v458 = vadd.f32 %v457, %v177
    %v459 = vadd.f32 %v458, %v178
    %v460 = vadd.f32 %v459, %v179
    %v461 = vadd.f32 %v460, %v180
    %v462 = vadd.f32 %v461, %v181
    %v463 = vadd.f32 %v462, %v182
    %v464 = vadd.f32 %v463, %v183
    %v465 = vadd.f32 %v464, %v184
    %v466 = vadd.f32 %v465, %v185
    %v467 = vadd.f32 %v466, %v186
    %v468 = vadd.f32 %v467, %v187
    %v469 = vadd.f32 %v468, %v188
    %v470 = vrot.slane %v469, 4
    %v471 = vadd.f32 %v469, %v470
    %v472 = vrot.slane %v471, 2
    %v473 = vadd.f32 %v471, %v472
    %v474 = vrot.slane %v473, 1
    %v475 = vadd.f32 %v473, %v474
    %v476 = vadd.f32 %v454, %v475
    %v477 = vsub.f32 %v476, %v433
    %v478 = vld [vmem:[#allocation5] sm:$0xff]
    %v479 = vadd.f32 %v478, %v433
    %480 = vst [vmem:[#allocation5] sm:$0xff] %v479
    %v481 = vld [vmem:[#allocation6] sm:$0xff]
    %v482 = vadd.f32 %v481, %v477
    %483 = vst [vmem:[#allocation6] sm:$0xff] %v482
    // Predicated region
    $region18: #{tpu_custom_call.1} parent=1 // pred_check
      _
    $region19: #{tpu_custom_call.1} parent=1 // pred_check_branch
      %485 = sbr.rel (0) target = $region21
    $region20: #{tpu_custom_call.1} parent=1 // pred_region
      %s487 = ssub.s32 128, 128
      %488 = vsyncadd [#allocation4], %s487
      %s490 = sshll.u32 [#allocation5], 4
      %s491 = int_to_ptr.vmem [resolvable:$true] %s490
      %493 = dma.vmem_to_hbm [thread:$0]  %s491, 128, %s2, [#allocation4]
    $region21: #{tpu_custom_call.1} parent=1 // pred_fallthru
      _
    // Predicated region
    $region22: #{tpu_custom_call.1} parent=1 // pred_check
      _
    $region23: #{tpu_custom_call.1} parent=1 // pred_check_branch
      %495 = sbr.rel (0) target = $region25
    $region24: #{tpu_custom_call.1} parent=1 // pred_region
      %s497 = ssub.s32 128, 128
      %498 = vsyncadd [#allocation7], %s497
      %s500 = sshll.u32 [#allocation6], 4
      %s501 = int_to_ptr.vmem [resolvable:$true] %s500
      %503 = dma.vmem_to_hbm [thread:$0]  %s501, 128, %s3, [#allocation7]
    $region25: #{tpu_custom_call.1} parent=1 // pred_fallthru
      _
    // Predicated region
    $region26: #{tpu_custom_call.1} parent=1 // pred_check
      _
    $region27: #{tpu_custom_call.1} parent=1 // pred_check_branch
      %505 = sbr.rel (0) target = $region29
    $region28: #{tpu_custom_call.1} parent=1 // pred_region
      %506 = dma.done [#allocation4], 128
    $region29: #{tpu_custom_call.1} parent=1 // pred_fallthru
      _
    // Predicated region
    $region30: #{tpu_custom_call.1} parent=1 // pred_check
      _
    $region31: #{tpu_custom_call.1} parent=1 // pred_check_branch
      %508 = sbr.rel (0) target = $region33
    $region32: #{tpu_custom_call.1} parent=1 // pred_region
      %509 = dma.done [#allocation7], 128
    $region33: #{tpu_custom_call.1} parent=1 // pred_fallthru
      _
    %510 = vsyncpa [#allocation3], 1
    %511 = vsyncpa [#allocation4], 1
    %512 = vsyncpa [#allocation7], 1

// kernel: tpu_custom_call.1
$region0: #{tpu_custom_call.1}
  #allocation0 [shape = 'u32[]', space=smem, size = 0x4, offset = 0x4, fixed_abs, tag = 'smem constant byte address 0x4 - core index']
  #allocation1 [shape = 'u32[144,128]{1,0:T(1,128)}', space=vmem, size = 0x12000, scoped, tag = 'internal scratch']
  %s0 = inlined_call_operand.vmem [shape: f32[128,128], index: 0, kind: input, shape index: {}]
  %s1 = inlined_call_operand.vmem [shape: s32[128,1], index: 1, kind: input, shape index: {}]
  %s2 = inlined_call_operand.hbm [shape: f32[8,128], index: 2, kind: output, shape index: {0}]
  %s3 = inlined_call_operand.hbm [shape: f32[8,128], index: 3, kind: output, shape index: {1}]
  %4 = xla_tuple %s2, %s3
  %s5 = sld [smem:[#allocation0]]
  $region30: #{tpu_custom_call.1} parent=0
    _
  %s7 = ssub.s32 1, %s5
  %s8 = scalar_select 0, %s7, %s5
  $region1: #{tpu_custom_call.1} parent=0
    #allocation2 [shape = 'u8[4096]{0}', space=vmem, size = 0x1000, scoped, tag = 'output window, operand 0, single buffered']
    #allocation3 [shape = 's32[1]{0}', space=sflag, size = 0x4, scoped, tag = 'scoped memory for tpu_custom_call.1']
    #allocation4 [shape = 'u8[4096]{0}', space=vmem, size = 0x1000, scoped, tag = 'output window, operand 1, single buffered']
    #allocation5 [shape = 's32[1]{0}', space=sflag, size = 0x4, scoped, tag = 'scoped memory for tpu_custom_call.1']
    %9 = vsyncpa [#allocation3], 0
    %10 = vsyncpa [#allocation5], 0
    // Predicated region
    $region2: #{tpu_custom_call.1} parent=1 // pred_check
      _
    $region3: #{tpu_custom_call.1} parent=1 // pred_check_branch
      %12 = sbr.rel (0) target = $region5
    $region4: #{tpu_custom_call.1} parent=1 // pred_region
      %s13 = sadd.s32 0, 0
      %s14 = smul.u32 16, %s13
      %p15 = scmp.lt.s32.totalorder %s14, 15
      %s16 = scalar_select %p15, %s14, 15
      %s17 = smul.addr %s16, 8
      %s18 = scalar_lea.vmem %s0, %s17
      %s19 = sadd.s32 0, 0
      %s20 = smul.u32 16, %s19
    $region5: #{tpu_custom_call.1} parent=1 // pred_fallthru
      _
    // Predicated region
    $region6: #{tpu_custom_call.1} parent=1 // pred_check
      _
    $region7: #{tpu_custom_call.1} parent=1 // pred_check_branch
      %22 = sbr.rel (0) target = $region9
    $region8: #{tpu_custom_call.1} parent=1 // pred_region
      %s23 = sadd.s32 0, 0
      %s24 = smul.u32 16, %s23
      %p25 = scmp.lt.s32.totalorder %s24, 15
      %s26 = scalar_select %p25, %s24, 15
      %s27 = smul.addr %s26, 8
      %s28 = scalar_lea.vmem %s1, %s27
      %s29 = sadd.s32 0, 0
      %s30 = smul.u32 16, %s29
    $region9: #{tpu_custom_call.1} parent=1 // pred_fallthru
      _
    %s31 = sadd.s32 0, 0
    %s32 = smul.u32 16, %s31
    %p33 = scmp.lt.s32.totalorder %s32, 15
    %s34 = scalar_select %p33, %s32, 15
    %s35 = smul.addr %s34, 8
    %s36 = scalar_lea.vmem %s0, %s35
    %s37 = sadd.s32 0, 0
    %s38 = smul.u32 16, %s37
    %p39 = scmp.lt.s32.totalorder %s38, 15
    %s40 = scalar_select %p39, %s38, 15
    %s41 = smul.addr %s40, 8
    %s42 = scalar_lea.vmem %s1, %s41
    %s43 = sadd.s32 0, 0
    %s44 = smul.u32 16, %s43
    %p45 = scmp.lt.s32.totalorder %s44, 15
    %s46 = scalar_select %p45, %s44, 15
    %s47 = smul.addr %s46, 8
    %s48 = scalar_lea.vmem %s0, %s47
    %s49 = sadd.s32 0, 0
    %s50 = smul.u32 16, %s49
    %s51 = sadd.s32 0, 0
    %s52 = smul.u32 16, %s51
    %p53 = scmp.lt.s32.totalorder %s52, 15
    %s54 = scalar_select %p53, %s52, 15
    %s55 = smul.addr %s54, 8
    %s56 = scalar_lea.vmem %s1, %s55
    %s57 = sadd.s32 0, 0
    %s58 = smul.u32 16, %s57
    %p59 = scmp.eq.s32.totalorder 0, 0
    // Predicated region
    $region10: #{tpu_custom_call.1} parent=1 // pred_check
      %p60 = pneg %p59
    $region11: #{tpu_custom_call.1} parent=1 // pred_check_branch
      %62 = sbr.rel (%p60) target = $region13
    $region12: #{tpu_custom_call.1} parent=1 // pred_region
      %63 = vst [vmem:[#allocation2] sm:$0xff] 0.0
      %64 = vst [vmem:[#allocation4] sm:$0xff] 0.0
    $region13: #{tpu_custom_call.1} parent=1 // pred_fallthru
      _
    %v65 = vld [vmem:[%s48] sm:$0xff]
    %v66 = vld [vmem:[%s48 + $0x8] sm:$0xff]
    %v67 = vld [vmem:[%s48 + $0x10] sm:$0xff]
    %v68 = vld [vmem:[%s48 + $0x18] sm:$0xff]
    %v69 = vld [vmem:[%s48 + $0x20] sm:$0xff]
    %v70 = vld [vmem:[%s48 + $0x28] sm:$0xff]
    %v71 = vld [vmem:[%s48 + $0x30] sm:$0xff]
    %v72 = vld [vmem:[%s48 + $0x38] sm:$0xff]
    %v73 = vld [vmem:[%s48 + $0x40] sm:$0xff]
    %v74 = vld [vmem:[%s48 + $0x48] sm:$0xff]
    %v75 = vld [vmem:[%s48 + $0x50] sm:$0xff]
    %v76 = vld [vmem:[%s48 + $0x58] sm:$0xff]
    %v77 = vld [vmem:[%s48 + $0x60] sm:$0xff]
    %v78 = vld [vmem:[%s48 + $0x68] sm:$0xff]
    %v79 = vld [vmem:[%s48 + $0x70] sm:$0xff]
    %v80 = vld [vmem:[%s48 + $0x78] sm:$0xff]
    %v81 = vld [vmem:[%s56] sm:$0xff]
    %v82 = vld [vmem:[%s56 + $0x8] sm:$0xff]
    %v83 = vld [vmem:[%s56 + $0x10] sm:$0xff]
    %v84 = vld [vmem:[%s56 + $0x18] sm:$0xff]
    %v85 = vld [vmem:[%s56 + $0x20] sm:$0xff]
    %v86 = vld [vmem:[%s56 + $0x28] sm:$0xff]
    %v87 = vld [vmem:[%s56 + $0x30] sm:$0xff]
    %v88 = vld [vmem:[%s56 + $0x38] sm:$0xff]
    %v89 = vld [vmem:[%s56 + $0x40] sm:$0xff]
    %v90 = vld [vmem:[%s56 + $0x48] sm:$0xff]
    %v91 = vld [vmem:[%s56 + $0x50] sm:$0xff]
    %v92 = vld [vmem:[%s56 + $0x58] sm:$0xff]
    %v93 = vld [vmem:[%s56 + $0x60] sm:$0xff]
    %v94 = vld [vmem:[%s56 + $0x68] sm:$0xff]
    %v95 = vld [vmem:[%s56 + $0x70] sm:$0xff]
    %v96 = vld [vmem:[%s56 + $0x78] sm:$0xff]
    %v97 = vlaneseq
    %v98 = vand.u32 %v97, 127
    %99 = vset.pattern.permute.xlu0 0
    %100 = vperm.xlu0 %99, %v81
    %v101 = vpop.permute.xlu0 %100
    %102 = vset.pattern.permute.xlu0 0
    %103 = vperm.xlu0 %102, %v82
    %v104 = vpop.permute.xlu0 %103
    %105 = vset.pattern.permute.xlu0 0
    %106 = vperm.xlu0 %105, %v83
    %v107 = vpop.permute.xlu0 %106
    %108 = vset.pattern.permute.xlu0 0
    %109 = vperm.xlu0 %108, %v84
    %v110 = vpop.permute.xlu0 %109
    %111 = vset.pattern.permute.xlu0 0
    %112 = vperm.xlu0 %111, %v85
    %v113 = vpop.permute.xlu0 %112
    %114 = vset.pattern.permute.xlu0 0
    %115 = vperm.xlu0 %114, %v86
    %v116 = vpop.permute.xlu0 %115
    %117 = vset.pattern.permute.xlu0 0
    %118 = vperm.xlu0 %117, %v87
    %v119 = vpop.permute.xlu0 %118
    %120 = vset.pattern.permute.xlu0 0
    %121 = vperm.xlu0 %120, %v88
    %v122 = vpop.permute.xlu0 %121
    %123 = vset.pattern.permute.xlu0 0
    %124 = vperm.xlu0 %123, %v89
    %v125 = vpop.permute.xlu0 %124
    %126 = vset.pattern.permute.xlu0 0
    %127 = vperm.xlu0 %126, %v90
    %v128 = vpop.permute.xlu0 %127
    %129 = vset.pattern.permute.xlu0 0
    %130 = vperm.xlu0 %129, %v91
    %v131 = vpop.permute.xlu0 %130
    %132 = vset.pattern.permute.xlu0 0
    %133 = vperm.xlu0 %132, %v92
    %v134 = vpop.permute.xlu0 %133
    %135 = vset.pattern.permute.xlu0 0
    %136 = vperm.xlu0 %135, %v93
    %v137 = vpop.permute.xlu0 %136
    %138 = vset.pattern.permute.xlu0 0
    %139 = vperm.xlu0 %138, %v94
    %v140 = vpop.permute.xlu0 %139
    %141 = vset.pattern.permute.xlu0 0
    %142 = vperm.xlu0 %141, %v95
    %v143 = vpop.permute.xlu0 %142
    %144 = vset.pattern.permute.xlu0 0
    %145 = vperm.xlu0 %144, %v96
    %v146 = vpop.permute.xlu0 %145
    %vm147 = vcmp.eq.s32.totalorder %v101, %v98
    %vm148 = vcmp.eq.s32.totalorder %v104, %v98
    %vm149 = vcmp.eq.s32.totalorder %v107, %v98
    %vm150 = vcmp.eq.s32.totalorder %v110, %v98
    %vm151 = vcmp.eq.s32.totalorder %v113, %v98
    %vm152 = vcmp.eq.s32.totalorder %v116, %v98
    %vm153 = vcmp.eq.s32.totalorder %v119, %v98
    %vm154 = vcmp.eq.s32.totalorder %v122, %v98
    %vm155 = vcmp.eq.s32.totalorder %v125, %v98
    %vm156 = vcmp.eq.s32.totalorder %v128, %v98
    %vm157 = vcmp.eq.s32.totalorder %v131, %v98
    %vm158 = vcmp.eq.s32.totalorder %v134, %v98
    %vm159 = vcmp.eq.s32.totalorder %v137, %v98
    %vm160 = vcmp.eq.s32.totalorder %v140, %v98
    %vm161 = vcmp.eq.s32.totalorder %v143, %v98
    %vm162 = vcmp.eq.s32.totalorder %v146, %v98
    %v163 = vsel %vm147, 1, 0
    %v164 = vsel %vm148, 1, 0
    %v165 = vsel %vm149, 1, 0
    %v166 = vsel %vm150, 1, 0
    %v167 = vsel %vm151, 1, 0
    %v168 = vsel %vm152, 1, 0
    %v169 = vsel %vm153, 1, 0
    %v170 = vsel %vm154, 1, 0
    %v171 = vsel %vm155, 1, 0
    %v172 = vsel %vm156, 1, 0
    %v173 = vsel %vm157, 1, 0
    %v174 = vsel %vm158, 1, 0
    %v175 = vsel %vm159, 1, 0
    %v176 = vsel %vm160, 1, 0
    %v177 = vsel %vm161, 1, 0
    %v178 = vsel %vm162, 1, 0
    %v179 = vcvt.s32.f32 %v163
    %v180 = vcvt.s32.f32 %v164
    %v181 = vcvt.s32.f32 %v165
    %v182 = vcvt.s32.f32 %v166
    %v183 = vcvt.s32.f32 %v167
    %v184 = vcvt.s32.f32 %v168
    %v185 = vcvt.s32.f32 %v169
    %v186 = vcvt.s32.f32 %v170
    %v187 = vcvt.s32.f32 %v171
    %v188 = vcvt.s32.f32 %v172
    %v189 = vcvt.s32.f32 %v173
    %v190 = vcvt.s32.f32 %v174
    %v191 = vcvt.s32.f32 %v175
    %v192 = vcvt.s32.f32 %v176
    %v193 = vcvt.s32.f32 %v177
    %v194 = vcvt.s32.f32 %v178
    %vm195 = vcmp.ge.s32.totalorder %v81, 0
    %vm196 = vcmp.ge.s32.totalorder %v82, 0
    %vm197 = vcmp.ge.s32.totalorder %v83, 0
    %vm198 = vcmp.ge.s32.totalorder %v84, 0
    %vm199 = vcmp.ge.s32.totalorder %v85, 0
    %vm200 = vcmp.ge.s32.totalorder %v86, 0
    %vm201 = vcmp.ge.s32.totalorder %v87, 0
    %vm202 = vcmp.ge.s32.totalorder %v88, 0
    %vm203 = vcmp.ge.s32.totalorder %v89, 0
    %vm204 = vcmp.ge.s32.totalorder %v90, 0
    %vm205 = vcmp.ge.s32.totalorder %v91, 0
    %vm206 = vcmp.ge.s32.totalorder %v92, 0
    %vm207 = vcmp.ge.s32.totalorder %v93, 0
    %vm208 = vcmp.ge.s32.totalorder %v94, 0
    %vm209 = vcmp.ge.s32.totalorder %v95, 0
    %vm210 = vcmp.ge.s32.totalorder %v96, 0
    %v211 = vsel %vm195, 1, 0
    %v212 = vsel %vm196, 1, 0
    %v213 = vsel %vm197, 1, 0
    %v214 = vsel %vm198, 1, 0
    %v215 = vsel %vm199, 1, 0
    %v216 = vsel %vm200, 1, 0
    %v217 = vsel %vm201, 1, 0
    %v218 = vsel %vm202, 1, 0
    %v219 = vsel %vm203, 1, 0
    %v220 = vsel %vm204, 1, 0
    %v221 = vsel %vm205, 1, 0
    %v222 = vsel %vm206, 1, 0
    %v223 = vsel %vm207, 1, 0
    %v224 = vsel %vm208, 1, 0
    %v225 = vsel %vm209, 1, 0
    %v226 = vsel %vm210, 1, 0
    %v227 = vcvt.s32.f32 %v211
    %v228 = vcvt.s32.f32 %v212
    %v229 = vcvt.s32.f32 %v213
    %v230 = vcvt.s32.f32 %v214
    %v231 = vcvt.s32.f32 %v215
    %v232 = vcvt.s32.f32 %v216
    %v233 = vcvt.s32.f32 %v217
    %v234 = vcvt.s32.f32 %v218
    %v235 = vcvt.s32.f32 %v219
    %v236 = vcvt.s32.f32 %v220
    %v237 = vcvt.s32.f32 %v221
    %v238 = vcvt.s32.f32 %v222
    %v239 = vcvt.s32.f32 %v223
    %v240 = vcvt.s32.f32 %v224
    %v241 = vcvt.s32.f32 %v225
    %v242 = vcvt.s32.f32 %v226
    %243 = vmax.xlane.f32.xlu0 %v65
    %v244 = vpop.xlane.xlu0 %243
    %245 = vmax.xlane.f32.xlu0 %v66
    %v246 = vpop.xlane.xlu0 %245
    %247 = vmax.xlane.f32.xlu0 %v67
    %v248 = vpop.xlane.xlu0 %247
    %249 = vmax.xlane.f32.xlu0 %v68
    %v250 = vpop.xlane.xlu0 %249
    %251 = vmax.xlane.f32.xlu0 %v69
    %v252 = vpop.xlane.xlu0 %251
    %253 = vmax.xlane.f32.xlu0 %v70
    %v254 = vpop.xlane.xlu0 %253
    %255 = vmax.xlane.f32.xlu0 %v71
    %v256 = vpop.xlane.xlu0 %255
    %257 = vmax.xlane.f32.xlu0 %v72
    %v258 = vpop.xlane.xlu0 %257
    %259 = vmax.xlane.f32.xlu0 %v73
    %v260 = vpop.xlane.xlu0 %259
    %261 = vmax.xlane.f32.xlu0 %v74
    %v262 = vpop.xlane.xlu0 %261
    %263 = vmax.xlane.f32.xlu0 %v75
    %v264 = vpop.xlane.xlu0 %263
    %265 = vmax.xlane.f32.xlu0 %v76
    %v266 = vpop.xlane.xlu0 %265
    %267 = vmax.xlane.f32.xlu0 %v77
    %v268 = vpop.xlane.xlu0 %267
    %269 = vmax.xlane.f32.xlu0 %v78
    %v270 = vpop.xlane.xlu0 %269
    %271 = vmax.xlane.f32.xlu0 %v79
    %v272 = vpop.xlane.xlu0 %271
    %273 = vmax.xlane.f32.xlu0 %v80
    %v274 = vpop.xlane.xlu0 %273
    %v275 = vsub.f32 %v65, %v244
    %v276 = vsub.f32 %v66, %v246
    %v277 = vsub.f32 %v67, %v248
    %v278 = vsub.f32 %v68, %v250
    %v279 = vsub.f32 %v69, %v252
    %v280 = vsub.f32 %v70, %v254
    %v281 = vsub.f32 %v71, %v256
    %v282 = vsub.f32 %v72, %v258
    %v283 = vsub.f32 %v73, %v260
    %v284 = vsub.f32 %v74, %v262
    %v285 = vsub.f32 %v75, %v264
    %v286 = vsub.f32 %v76, %v266
    %v287 = vsub.f32 %v77, %v268
    %v288 = vsub.f32 %v78, %v270
    %v289 = vsub.f32 %v79, %v272
    %v290 = vsub.f32 %v80, %v274
    %v291 = vmul.f32 %v275, 1.442695
    %v292 = vpow.pop %v291
    %v293 = vmul.f32 %v276, 1.442695
    %v294 = vpow.pop %v293
    %v295 = vmul.f32 %v277, 1.442695
    %v296 = vpow.pop %v295
    %v297 = vmul.f32 %v278, 1.442695
    %v298 = vpow.pop %v297
    %v299 = vmul.f32 %v279, 1.442695
    %v300 = vpow.pop %v299
    %v301 = vmul.f32 %v280, 1.442695
    %v302 = vpow.pop %v301
    %v303 = vmul.f32 %v281, 1.442695
    %v304 = vpow.pop %v303
    %v305 = vmul.f32 %v282, 1.442695
    %v306 = vpow.pop %v305
    %v307 = vmul.f32 %v283, 1.442695
    %v308 = vpow.pop %v307
    %v309 = vmul.f32 %v284, 1.442695
    %v310 = vpow.pop %v309
    %v311 = vmul.f32 %v285, 1.442695
    %v312 = vpow.pop %v311
    %v313 = vmul.f32 %v286, 1.442695
    %v314 = vpow.pop %v313
    %v315 = vmul.f32 %v287, 1.442695
    %v316 = vpow.pop %v315
    %v317 = vmul.f32 %v288, 1.442695
    %v318 = vpow.pop %v317
    %v319 = vmul.f32 %v289, 1.442695
    %v320 = vpow.pop %v319
    %v321 = vmul.f32 %v290, 1.442695
    %v322 = vpow.pop %v321
    %323 = vadd.xlane.f32.xlu0 %v292
    %v324 = vpop.xlane.xlu0 %323
    %325 = vadd.xlane.f32.xlu0 %v294
    %v326 = vpop.xlane.xlu0 %325
    %327 = vadd.xlane.f32.xlu0 %v296
    %v328 = vpop.xlane.xlu0 %327
    %329 = vadd.xlane.f32.xlu0 %v298
    %v330 = vpop.xlane.xlu0 %329
    %331 = vadd.xlane.f32.xlu0 %v300
    %v332 = vpop.xlane.xlu0 %331
    %333 = vadd.xlane.f32.xlu0 %v302
    %v334 = vpop.xlane.xlu0 %333
    %335 = vadd.xlane.f32.xlu0 %v304
    %v336 = vpop.xlane.xlu0 %335
    %337 = vadd.xlane.f32.xlu0 %v306
    %v338 = vpop.xlane.xlu0 %337
    %339 = vadd.xlane.f32.xlu0 %v308
    %v340 = vpop.xlane.xlu0 %339
    %341 = vadd.xlane.f32.xlu0 %v310
    %v342 = vpop.xlane.xlu0 %341
    %343 = vadd.xlane.f32.xlu0 %v312
    %v344 = vpop.xlane.xlu0 %343
    %345 = vadd.xlane.f32.xlu0 %v314
    %v346 = vpop.xlane.xlu0 %345
    %347 = vadd.xlane.f32.xlu0 %v316
    %v348 = vpop.xlane.xlu0 %347
    %349 = vadd.xlane.f32.xlu0 %v318
    %v350 = vpop.xlane.xlu0 %349
    %351 = vadd.xlane.f32.xlu0 %v320
    %v352 = vpop.xlane.xlu0 %351
    %353 = vadd.xlane.f32.xlu0 %v322
    %v354 = vpop.xlane.xlu0 %353
    %v355 = vrcp.pop %v324
    %v356 = vrcp.pop %v326
    %v357 = vrcp.pop %v328
    %v358 = vrcp.pop %v330
    %v359 = vrcp.pop %v332
    %v360 = vrcp.pop %v334
    %v361 = vrcp.pop %v336
    %v362 = vrcp.pop %v338
    %v363 = vrcp.pop %v340
    %v364 = vrcp.pop %v342
    %v365 = vrcp.pop %v344
    %v366 = vrcp.pop %v346
    %v367 = vrcp.pop %v348
    %v368 = vrcp.pop %v350
    %v369 = vrcp.pop %v352
    %v370 = vrcp.pop %v354
    %v371 = vmul.f32 %v355, %v227
    %v372 = vmul.f32 %v356, %v228
    %v373 = vmul.f32 %v357, %v229
    %v374 = vmul.f32 %v358, %v230
    %v375 = vmul.f32 %v359, %v231
    %v376 = vmul.f32 %v360, %v232
    %v377 = vmul.f32 %v361, %v233
    %v378 = vmul.f32 %v362, %v234
    %v379 = vmul.f32 %v363, %v235
    %v380 = vmul.f32 %v364, %v236
    %v381 = vmul.f32 %v365, %v237
    %v382 = vmul.f32 %v366, %v238
    %v383 = vmul.f32 %v367, %v239
    %v384 = vmul.f32 %v368, %v240
    %v385 = vmul.f32 %v369, %v241
    %v386 = vmul.f32 %v370, %v242
    %388 = vset.pattern.permute.xlu0 0
    %389 = vperm.xlu0 %388, %v371
    %v390 = vpop.permute.xlu0 %389
    %393 = vset.pattern.permute.xlu0 0
    %394 = vperm.xlu0 %393, %v372
    %v395 = vpop.permute.xlu0 %394
    %398 = vset.pattern.permute.xlu0 0
    %399 = vperm.xlu0 %398, %v373
    %v400 = vpop.permute.xlu0 %399
    %403 = vset.pattern.permute.xlu0 0
    %404 = vperm.xlu0 %403, %v374
    %v405 = vpop.permute.xlu0 %404
    %408 = vset.pattern.permute.xlu0 0
    %409 = vperm.xlu0 %408, %v375
    %v410 = vpop.permute.xlu0 %409
    %413 = vset.pattern.permute.xlu0 0
    %414 = vperm.xlu0 %413, %v376
    %v415 = vpop.permute.xlu0 %414
    %418 = vset.pattern.permute.xlu0 0
    %419 = vperm.xlu0 %418, %v377
    %v420 = vpop.permute.xlu0 %419
    %423 = vset.pattern.permute.xlu0 0
    %424 = vperm.xlu0 %423, %v378
    %v425 = vpop.permute.xlu0 %424
    %428 = vset.pattern.permute.xlu0 0
    %429 = vperm.xlu0 %428, %v379
    %v430 = vpop.permute.xlu0 %429
    %433 = vset.pattern.permute.xlu0 0
    %434 = vperm.xlu0 %433, %v380
    %v435 = vpop.permute.xlu0 %434
    %438 = vset.pattern.permute.xlu0 0
    %439 = vperm.xlu0 %438, %v381
    %v440 = vpop.permute.xlu0 %439
    %443 = vset.pattern.permute.xlu0 0
    %444 = vperm.xlu0 %443, %v382
    %v445 = vpop.permute.xlu0 %444
    %448 = vset.pattern.permute.xlu0 0
    %449 = vperm.xlu0 %448, %v383
    %v450 = vpop.permute.xlu0 %449
    %453 = vset.pattern.permute.xlu0 0
    %454 = vperm.xlu0 %453, %v384
    %v455 = vpop.permute.xlu0 %454
    %458 = vset.pattern.permute.xlu0 0
    %459 = vperm.xlu0 %458, %v385
    %v460 = vpop.permute.xlu0 %459
    %463 = vset.pattern.permute.xlu0 0
    %464 = vperm.xlu0 %463, %v386
    %v465 = vpop.permute.xlu0 %464
    %v467 = vmul.f32 %v292, %v390
    %v468 = vmul.f32 %v294, %v395
    %v469 = vmul.f32 %v296, %v400
    %v470 = vmul.f32 %v298, %v405
    %v471 = vmul.f32 %v300, %v410
    %v472 = vmul.f32 %v302, %v415
    %v473 = vmul.f32 %v304, %v420
    %v474 = vmul.f32 %v306, %v425
    %v475 = vmul.f32 %v308, %v430
    %v476 = vmul.f32 %v310, %v435
    %v477 = vmul.f32 %v312, %v440
    %v478 = vmul.f32 %v314, %v445
    %v479 = vmul.f32 %v316, %v450
    %v480 = vmul.f32 %v318, %v455
    %v481 = vmul.f32 %v320, %v460
    %v482 = vmul.f32 %v322, %v465
    %v483 = vmul.f32 %v467, %v179
    %v484 = vmul.f32 %v468, %v180
    %v485 = vmul.f32 %v469, %v181
    %v486 = vmul.f32 %v470, %v182
    %v487 = vmul.f32 %v471, %v183
    %v488 = vmul.f32 %v472, %v184
    %v489 = vmul.f32 %v473, %v185
    %v490 = vmul.f32 %v474, %v186
    %v491 = vmul.f32 %v475, %v187
    %v492 = vmul.f32 %v476, %v188
    %v493 = vmul.f32 %v477, %v189
    %v494 = vmul.f32 %v478, %v190
    %v495 = vmul.f32 %v479, %v191
    %v496 = vmul.f32 %v480, %v192
    %v497 = vmul.f32 %v481, %v193
    %v498 = vmul.f32 %v482, %v194
    %v499 = vadd.f32 %v483, %v484
    %v500 = vadd.f32 %v499, %v485
    %v501 = vadd.f32 %v500, %v486
    %v502 = vadd.f32 %v501, %v487
    %v503 = vadd.f32 %v502, %v488
    %v504 = vadd.f32 %v503, %v489
    %v505 = vadd.f32 %v504, %v490
    %v506 = vadd.f32 %v505, %v491
    %v507 = vadd.f32 %v506, %v492
    %v508 = vadd.f32 %v507, %v493
    %v509 = vadd.f32 %v508, %v494
    %v510 = vadd.f32 %v509, %v495
    %v511 = vadd.f32 %v510, %v496
    %v512 = vadd.f32 %v511, %v497
    %v513 = vadd.f32 %v512, %v498
    %v514 = vrot.slane %v513, 4
    %v515 = vadd.f32 %v513, %v514
    %v516 = vrot.slane %v515, 2
    %v517 = vadd.f32 %v515, %v516
    %v518 = vrot.slane %v517, 1
    %v519 = vadd.f32 %v517, %v518
    %v520 = vadd.f32 %v467, %v468
    %v521 = vadd.f32 %v520, %v469
    %v522 = vadd.f32 %v521, %v470
    %v523 = vadd.f32 %v522, %v471
    %v524 = vadd.f32 %v523, %v472
    %v525 = vadd.f32 %v524, %v473
    %v526 = vadd.f32 %v525, %v474
    %v527 = vadd.f32 %v526, %v475
    %v528 = vadd.f32 %v527, %v476
    %v529 = vadd.f32 %v528, %v477
    %v530 = vadd.f32 %v529, %v478
    %v531 = vadd.f32 %v530, %v479
    %v532 = vadd.f32 %v531, %v480
    %v533 = vadd.f32 %v532, %v481
    %v534 = vadd.f32 %v533, %v482
    %v535 = vrot.slane %v534, 4
    %v536 = vadd.f32 %v534, %v535
    %v537 = vrot.slane %v536, 2
    %v538 = vadd.f32 %v536, %v537
    %v539 = vrot.slane %v538, 1
    %v540 = vadd.f32 %v538, %v539
    %v541 = vadd.f32 %v179, %v180
    %v542 = vadd.f32 %v541, %v181
    %v543 = vadd.f32 %v542, %v182
    %v544 = vadd.f32 %v543, %v183
    %v545 = vadd.f32 %v544, %v184
    %v546 = vadd.f32 %v545, %v185
    %v547 = vadd.f32 %v546, %v186
    %v548 = vadd.f32 %v547, %v187
    %v549 = vadd.f32 %v548, %v188
    %v550 = vadd.f32 %v549, %v189
    %v551 = vadd.f32 %v550, %v190
    %v552 = vadd.f32 %v551, %v191
    %v553 = vadd.f32 %v552, %v192
    %v554 = vadd.f32 %v553, %v193
    %v555 = vadd.f32 %v554, %v194
    %v556 = vrot.slane %v555, 4
    %v557 = vadd.f32 %v555, %v556
    %v558 = vrot.slane %v557, 2
    %v559 = vadd.f32 %v557, %v558
    %v560 = vrot.slane %v559, 1
    %v561 = vadd.f32 %v559, %v560
    %v562 = vadd.f32 %v540, %v561
    %v563 = vsub.f32 %v562, %v519
    %v564 = vld [vmem:[#allocation2] sm:$0xff]
    %v565 = vadd.f32 %v564, %v519
    %566 = vst [vmem:[#allocation2] sm:$0xff] %v565
    %v567 = vld [vmem:[#allocation4] sm:$0xff]
    %v568 = vadd.f32 %v567, %v563
    %569 = vst [vmem:[#allocation4] sm:$0xff] %v568
    // Predicated region
    $region14: #{tpu_custom_call.1} parent=1 // pred_check
      _
    $region15: #{tpu_custom_call.1} parent=1 // pred_check_branch
      %571 = sbr.rel (0) target = $region17
    $region16: #{tpu_custom_call.1} parent=1 // pred_region
      %s573 = ssub.s32 128, 128
      %574 = vsyncadd [#allocation3], %s573
      %s576 = sshll.u32 [#allocation2], 4
      %s577 = int_to_ptr.vmem [resolvable:$true] %s576
      %579 = dma.vmem_to_hbm [thread:$0]  %s577, 128, %s2, [#allocation3]
    $region17: #{tpu_custom_call.1} parent=1 // pred_fallthru
      _
    // Predicated region
    $region18: #{tpu_custom_call.1} parent=1 // pred_check
      _
    $region19: #{tpu_custom_call.1} parent=1 // pred_check_branch
      %581 = sbr.rel (0) target = $region21
    $region20: #{tpu_custom_call.1} parent=1 // pred_region
      %s583 = ssub.s32 128, 128
      %584 = vsyncadd [#allocation5], %s583
      %s586 = sshll.u32 [#allocation4], 4
      %s587 = int_to_ptr.vmem [resolvable:$true] %s586
      %589 = dma.vmem_to_hbm [thread:$0]  %s587, 128, %s3, [#allocation5]
    $region21: #{tpu_custom_call.1} parent=1 // pred_fallthru
      _
    // Predicated region
    $region22: #{tpu_custom_call.1} parent=1 // pred_check
      _
    $region23: #{tpu_custom_call.1} parent=1 // pred_check_branch
      %591 = sbr.rel (0) target = $region25
    $region24: #{tpu_custom_call.1} parent=1 // pred_region
      %592 = dma.done [#allocation3], 128
    $region25: #{tpu_custom_call.1} parent=1 // pred_fallthru
      _
    // Predicated region
    $region26: #{tpu_custom_call.1} parent=1 // pred_check
      _
    $region27: #{tpu_custom_call.1} parent=1 // pred_check_branch
      %594 = sbr.rel (0) target = $region29
    $region28: #{tpu_custom_call.1} parent=1 // pred_region
      %595 = dma.done [#allocation5], 128
    $region29: #{tpu_custom_call.1} parent=1 // pred_fallthru
      _
    %596 = vsyncpa [#allocation3], 1
    %597 = vsyncpa [#allocation5], 1

</llo_original>
